<compile_context>
chip_gen: v5e
topology: v5e:2x2
jax: 0.10.0
libtpu: 0.0.40
codegen_flags: <defaults>
</compile_context>

<pallas_src>
import jax
import jax.numpy as jnp
from jax.experimental import pallas as pl
from jax.experimental.pallas import tpu as pltpu

FEATURE_LEN = 32
HIDDEN = 100       # nn.Linear(feature_len, 100)
HIDDEN_PAD = 128   # padded to the 128-lane width


# ---------------------------------------------------------------------------
# In-kernel helpers
# ---------------------------------------------------------------------------
def _log_softmax_pair(a, b):
    """Elementwise 2-way log-softmax over columns [a, b] (no concat/reduce)."""
    m = jnp.maximum(a, b)
    lse = m + jnp.log(jnp.exp(a - m) + jnp.exp(b - m))
    return a - lse, b - lse


# ---------------------------------------------------------------------------
# Kernels
# ---------------------------------------------------------------------------
def _predictor_simple_kernel(v1_ref, v2_ref, w_ref, b_ref, o_ref):
    """use_multilayer=False: one fused matmul for both vectors + 2-way logsoftmax."""
    tb = v1_ref.shape[0]
    x = jnp.concatenate([v1_ref[...], v2_ref[...]], axis=0)          # (2*TB, F)
    bias = b_ref[0, 0]                                               # SMEM scalar
    logits = jnp.dot(x, w_ref[...],
                     preferred_element_type=jnp.float32) + bias      # (2*TB, 1)
    a = logits[:tb]                                                  # (TB, 1)
    b = logits[tb:]                                                  # (TB, 1)
    la, lb = _log_softmax_pair(a, b)
    o_ref[:, 0:1] = la.astype(o_ref.dtype)
    o_ref[:, 1:2] = lb.astype(o_ref.dtype)


def _predictor_multilayer_kernel(v1_ref, v2_ref, w1_ref, b1_ref, w2_ref, b2_ref,
                                 o_ref):
    """use_multilayer=True: linear2(relu(linear1(.))) fused for both vectors."""
    tb = v1_ref.shape[0]
    x = jnp.concatenate([v1_ref[...], v2_ref[...]], axis=0)          # (2*TB, F)
    h = jnp.dot(x, w1_ref[...],
                preferred_element_type=jnp.float32) + b1_ref[...]    # (2*TB, Hp)
    h = jnp.maximum(h, 0.0)
    bias2 = b2_ref[0, 0]                                             # SMEM scalar
    logits = jnp.dot(h, w2_ref[...],
                     preferred_element_type=jnp.float32) + bias2     # (2*TB, 1)
    a = logits[:tb]
    b = logits[tb:]
    la, lb = _log_softmax_pair(a, b)
    o_ref[:, 0:1] = la.astype(o_ref.dtype)
    o_ref[:, 1:2] = lb.astype(o_ref.dtype)


# ---------------------------------------------------------------------------
# Wrappers
# ---------------------------------------------------------------------------
def _pick_tile_b(batch, target=4096):
    """Full batch for small B; otherwise the largest multiple-of-8 divisor <= target."""
    if batch <= target:
        return batch
    t = target - (target % 8)
    while t >= 8:
        if batch % t == 0:
            return t
        t -= 8
    return batch  # fallback: single block


def predictor_forward(vec1, vec2, packed, use_multilayer=False):
    """Pallas equivalent of Predictor.forward using pre-packed params."""
    B, F = vec1.shape
    tb = _pick_tile_b(B)
    grid = (B // tb,)

    vec_spec = pl.BlockSpec((tb, F), lambda i: (i, 0))
    out_spec = pl.BlockSpec((tb, 2), lambda i: (i, 0))
    smem_spec = pl.BlockSpec(memory_space=pltpu.MemorySpace.SMEM)
    out_shape = jax.ShapeDtypeStruct((B, 2), jnp.float32)
    cparams = pltpu.CompilerParams(dimension_semantics=("parallel",))

    if use_multilayer:
        w1 = packed["w1_t"]          # (F, HIDDEN_PAD)
        b1 = packed["b1_p"]          # (1, HIDDEN_PAD)
        w2 = packed["w2_t"]          # (HIDDEN_PAD, 1)
        b2 = packed["b2"]            # (1, 1)  -> SMEM
        hp = w1.shape[1]
        return pl.pallas_call(
            _predictor_multilayer_kernel,
            out_shape=out_shape,
            grid=grid,
            in_specs=[vec_spec, vec_spec,
                      pl.BlockSpec((F, hp), lambda i: (0, 0)),
                      pl.BlockSpec((1, hp), lambda i: (0, 0)),
                      pl.BlockSpec((hp, 1), lambda i: (0, 0)),
                      smem_spec],
            out_specs=out_spec,
            compiler_params=cparams,
        )(vec1, vec2, w1, b1, w2, b2)
    else:
        w = packed["w_t"]            # (F, 1)
        b = packed["b"]              # (1, 1)  -> SMEM
        return pl.pallas_call(
            _predictor_simple_kernel,
            out_shape=out_shape,
            grid=grid,
            in_specs=[vec_spec, vec_spec,
                      pl.BlockSpec((F, 1), lambda i: (0, 0)),
                      smem_spec],
            out_specs=out_spec,
            compiler_params=cparams,
        )(vec1, vec2, w, b)


def pack_params(p):
    """One-time weight packing: transpose, pad HIDDEN->128, reshape biases."""
    feat = p["w"].shape[1]
    w1_t = jnp.zeros((feat, HIDDEN_PAD), jnp.float32).at[:, :HIDDEN].set(p["w1"].T)
    b1_p = jnp.zeros((1, HIDDEN_PAD), jnp.float32).at[:, :HIDDEN].set(p["b1"][None, :])
    w2_t = jnp.zeros((HIDDEN_PAD, 1), jnp.float32).at[:HIDDEN, :].set(p["w2"].T)
    return {
        "w_t": p["w"].T,                 # (F, 1)
        "b": p["b"].reshape(1, 1),       # (1, 1)
        "w1_t": w1_t,                    # (F, 128)
        "b1_p": b1_p,                    # (1, 128)
        "w2_t": w2_t,                    # (128, 1)
        "b2": p["b2"].reshape(1, 1),     # (1, 1)
    }


def predictor_reference(vec1, vec2, params, use_multilayer=False):
    """Plain-JAX reference mirroring the PyTorch forward exactly (raw params)."""
    if use_multilayer:
        def mlp(x):
            h = jnp.maximum(x @ params["w1"].T + params["b1"], 0.0)
            return h @ params["w2"].T + params["b2"]
        a, b = mlp(vec1), mlp(vec2)
    else:
        a = vec1 @ params["w"].T + params["b"]
        b = vec2 @ params["w"].T + params["b"]
    combined = jnp.concatenate([a, b], axis=1)
    return jax.nn.log_softmax(combined, axis=1)


def init_params(key, feature_len):
    """Deterministic parameter init matching nn.Linear shapes (torch layout)."""
    k = jax.random.split(key, 6)
    return {
        # self.linear = nn.Linear(feature_len, 1)
        "w": jax.random.normal(k[0], (1, feature_len), jnp.float32) * 0.1,
        "b": jax.random.normal(k[1], (1,), jnp.float32) * 0.1,
        # self.linear1 = nn.Linear(feature_len, 100)
        "w1": jax.random.normal(k[2], (HIDDEN, feature_len), jnp.float32) * 0.1,
        "b1": jax.random.normal(k[3], (HIDDEN,), jnp.float32) * 0.1,
        # self.linear2 = nn.Linear(100, 1)
        "w2": jax.random.normal(k[4], (1, HIDDEN), jnp.float32) * 0.1,
        "b2": jax.random.normal(k[5], (1,), jnp.float32) * 0.1,
    }


if __name__ == "__main__":
    key = jax.random.PRNGKey(0)
    k_v1, k_v2, k_p = jax.random.split(key, 3)

    B = 8
    vec1 = jax.random.normal(k_v1, (B, FEATURE_LEN), jnp.float32)
    vec2 = jax.random.normal(k_v2, (B, FEATURE_LEN), jnp.float32)

    raw_params = init_params(k_p, FEATURE_LEN)
    packed_params = pack_params(raw_params)   # one-time transpose/pad/reshape

    ok = True
    for use_multilayer in (False, True):
        out = predictor_forward(vec1, vec2, packed_params,
                                use_multilayer=use_multilayer)
        out = jax.block_until_ready(out)
        ref = predictor_reference(vec1, vec2, raw_params,
                                  use_multilayer=use_multilayer)
        if not jnp.allclose(out, ref, atol=1e-5, rtol=1e-5):
            ok = False

    if ok:
        print("KERNEL_OK")
</pallas_src>

<mosaic_0001>
module attributes {stable_mosaic.version = 11 : i64} {
  func.func @_predictor_simple_kernel(%arg0: i32, %arg1: memref<8x32xf32, #tpu.memory_space<vmem>>, %arg2: memref<8x32xf32, #tpu.memory_space<vmem>>, %arg3: memref<32x1xf32, #tpu.memory_space<vmem>>, %arg4: memref<1x1xf32, #tpu.memory_space<smem>>, %arg5: memref<8x2xf32, #tpu.memory_space<vmem>>) attributes {dimension_semantics = [#tpu.dimension_semantics<parallel>], iteration_bounds = array<i64: 1>, scalar_prefetch = 0 : i64, scratch_operands = 0 : i64, tpu.core_type = #tpu.core_type<tc>, window_params = [{transform_indices = @transform_0, window_bounds = array<i64: 8, 32>}, {transform_indices = @transform_1, window_bounds = array<i64: 8, 32>}, {pipeline_mode = #tpu.pipeline_mode<synchronous>, transform_indices = @transform_2, window_bounds = array<i64: 32, 1>}, {transform_indices = @transform_3, window_bounds = array<i64: 1, 1>}, {transform_indices = @transform_4, window_bounds = array<i64: 8, 2>}]} {
    %c0 = arith.constant 0 : index
    %c0_0 = arith.constant 0 : index
    %0 = vector.load %arg1[%c0, %c0_0] : memref<8x32xf32, #tpu.memory_space<vmem>>, vector<8x32xf32>
    %c0_1 = arith.constant 0 : index
    %c0_2 = arith.constant 0 : index
    %1 = vector.load %arg2[%c0_1, %c0_2] : memref<8x32xf32, #tpu.memory_space<vmem>>, vector<8x32xf32>
    %2 = tpu.concatenate %0, %1 in 0 : vector<8x32xf32>, vector<8x32xf32> -> vector<16x32xf32>
    %c0_3 = arith.constant 0 : index
    %c0_4 = arith.constant 0 : index
    %3 = memref.load %arg4[%c0_3, %c0_4] : memref<1x1xf32, #tpu.memory_space<smem>>
    %c0_5 = arith.constant 0 : index
    %c0_6 = arith.constant 0 : index
    %4 = vector.load %arg3[%c0_5, %c0_6] : memref<32x1xf32, #tpu.memory_space<vmem>>, vector<32x1xf32>
    %cst = arith.constant dense<0.000000e+00> : vector<16x1xf32>
    %5 = tpu.matmul %2, %4, %cst {dimension_numbers = #tpu.dot_dimension_numbers<[1], [0], [0], [1], [0, 0, 1, 1], [], []>} : vector<16x32xf32>, vector<32x1xf32>, vector<16x1xf32> -> vector<16x1xf32>
    %6 = vector.broadcast %3 : f32 to vector<16x1xf32>
    %7 = arith.addf %5, %6 : vector<16x1xf32>
    %8 = vector.extract_strided_slice %7 {offsets = [0, 0], sizes = [8, 1], strides = [1, 1]} : vector<16x1xf32> to vector<8x1xf32>
    %9 = vector.extract_strided_slice %7 {offsets = [8, 0], sizes = [8, 1], strides = [1, 1]} : vector<16x1xf32> to vector<8x1xf32>
    %10 = arith.maximumf %8, %9 : vector<8x1xf32>
    %11 = arith.subf %8, %10 : vector<8x1xf32>
    %12 = math.exp %11 : vector<8x1xf32>
    %13 = arith.subf %9, %10 : vector<8x1xf32>
    %14 = math.exp %13 : vector<8x1xf32>
    %15 = arith.addf %12, %14 : vector<8x1xf32>
    %16 = math.log %15 : vector<8x1xf32>
    %17 = arith.addf %10, %16 : vector<8x1xf32>
    %18 = arith.subf %8, %17 : vector<8x1xf32>
    %19 = arith.subf %9, %17 : vector<8x1xf32>
    %c0_7 = arith.constant 0 : index
    %c0_8 = arith.constant 0 : index
    %20 = vector.load %arg5[%c0_7, %c0_8] : memref<8x2xf32, #tpu.memory_space<vmem>>, vector<8x1xf32>
    tpu.vector_store %arg5[%c0_7, %c0_8], %18 {strides = array<i32>} : memref<8x2xf32, #tpu.memory_space<vmem>>, vector<8x1xf32>,
    %c0_9 = arith.constant 0 : index
    %c1 = arith.constant 1 : index
    %21 = vector.load %arg5[%c0_9, %c1] : memref<8x2xf32, #tpu.memory_space<vmem>>, vector<8x1xf32>
    tpu.vector_store %arg5[%c0_9, %c1], %19 {strides = array<i32>} : memref<8x2xf32, #tpu.memory_space<vmem>>, vector<8x1xf32>,
    return
  }
  func.func @transform_0(%arg0: i32) -> (i32, i32) {
    %c0_i32 = arith.constant 0 : i32
    %c0_i32_0 = arith.constant 0 : i32
    return %arg0, %c0_i32 : i32, i32
  }
  func.func @transform_1(%arg0: i32) -> (i32, i32) {
    %c0_i32 = arith.constant 0 : i32
    %c0_i32_0 = arith.constant 0 : i32
    return %arg0, %c0_i32 : i32, i32
  }
  func.func @transform_2(%arg0: i32) -> (i32, i32) {
    %c0_i32 = arith.constant 0 : i32
    %c0_i32_0 = arith.constant 0 : i32
    %c0_i32_1 = arith.constant 0 : i32
    return %c0_i32, %c0_i32_0 : i32, i32
  }
  func.func @transform_3(%arg0: i32) -> (i32, i32) {
    %c0_i32 = arith.constant 0 : i32
    %c0_i32_0 = arith.constant 0 : i32
    %c0_i32_1 = arith.constant 0 : i32
    return %c0_i32, %c0_i32_0 : i32, i32
  }
  func.func @transform_4(%arg0: i32) -> (i32, i32) {
    %c0_i32 = arith.constant 0 : i32
    %c0_i32_0 = arith.constant 0 : i32
    return %arg0, %c0_i32 : i32, i32
  }
}

</mosaic_0001>

<llo_original>
// kernel: tpu_custom_call.1
$region0: #{tpu_custom_call.1}
  #allocation0 [shape = 'u32[]', space=smem, size = 0x4, offset = 0x4, fixed_abs, tag = 'smem constant byte address 0x4 - core index']
  #allocation1 [shape = 'u32[72,128]{1,0:T(1,128)}', space=vmem, size = 0x9000, scoped, tag = 'internal scratch']
  #allocation2 [shape = 'f32[1,1]{1,0:T(1,128)S(6)}', space=smem, size = 0x200, scoped, tag = 'scoped memory for tpu_custom_call.1']
  %s0 = inlined_call_operand.vmem [shape: f32[8,32], index: 0, kind: input, shape index: {}]
  %s1 = inlined_call_operand.vmem [shape: f32[8,32], index: 1, kind: input, shape index: {}]
  %s2 = inlined_call_operand.vmem [shape: f32[32,1], index: 2, kind: input, shape index: {}]
  %s3 = inlined_call_operand.<no memory space> [shape: f32[1,1], index: 3, kind: input, shape index: {}]
  %s4 = inlined_call_operand.vmem [shape: f32[8,2], index: 4, kind: output, shape index: {}]
  %s5 = sld [smem:[#allocation0]]
  $region26: #{tpu_custom_call.1} parent=0
    _
  %s7 = ssub.s32 1, %s5
  %s8 = scalar_select 0, %s7, %s5
  %9 = sst [smem:[#allocation2]] %s3
  // Predicated region
  $region2: #{tpu_custom_call.1} parent=0 // pred_check
    _
  $region3: #{tpu_custom_call.1} parent=0 // pred_check_branch
    %11 = sbr.rel (0) target = $region5
  $region4: #{tpu_custom_call.1} parent=0 // pred_region
    _
  $region5: #{tpu_custom_call.1} parent=0 // pred_fallthru
    _
  // Predicated region
  $region6: #{tpu_custom_call.1} parent=0 // pred_check
    _
  $region7: #{tpu_custom_call.1} parent=0 // pred_check_branch
    %13 = sbr.rel (0) target = $region9
  $region8: #{tpu_custom_call.1} parent=0 // pred_region
    _
  $region9: #{tpu_custom_call.1} parent=0 // pred_fallthru
    _
  // Predicated region
  $region10: #{tpu_custom_call.1} parent=0 // pred_check
    _
  $region11: #{tpu_custom_call.1} parent=0 // pred_check_branch
    %15 = sbr.rel (0) target = $region13
  $region12: #{tpu_custom_call.1} parent=0 // pred_region
    _
  $region13: #{tpu_custom_call.1} parent=0 // pred_fallthru
    _
  // Predicated region
  $region14: #{tpu_custom_call.1} parent=0 // pred_check
    _
  $region15: #{tpu_custom_call.1} parent=0 // pred_check_branch
    %17 = sbr.rel (0) target = $region17
  $region16: #{tpu_custom_call.1} parent=0 // pred_region
    _
  $region17: #{tpu_custom_call.1} parent=0 // pred_fallthru
    _
  %v18 = vld [vmem:[%s0] sm:$0xff]
  %v19 = vld [vmem:[%s1] sm:$0xff]
  %s20 = sld [smem:[#allocation2]]
  %v21 = vld [vmem:[%s2] sm:$0xff]
  %v22 = vld [vmem:[%s2 + $0x8] sm:$0xff]
  %v23 = vld [vmem:[%s2 + $0x10] sm:$0xff]
  %v24 = vld [vmem:[%s2 + $0x18] sm:$0xff]
  %v25 = vstv %s20
  %vm26 = vcmask 261120
  %v28 = vsel %vm26, %v18, 0
  %v31 = vsel %vm26, %v19, 0
  %33 = vmatpush.msra.mxu0 0.0
  %34 = vmatpush.msra.mxu0 0.0
  %35 = vmatpush.msra.mxu0 0.0
  %36 = vmatpush.msra.mxu0 0.0
  %37 = vmatpush.msra.mxu0 0.0
  %38 = vmatpush.msra.mxu0 0.0
  %39 = vmatpush.msra.mxu0 0.0
  %40 = vmatpush.msra.mxu0 0.0
  %41 = vmatpush.msra.mxu0 0.0
  %42 = vmatpush.msra.mxu0 0.0
  %43 = vmatpush.msra.mxu0 0.0
  %44 = vmatpush.msra.mxu0 0.0
  %45 = vmatpush.msra.mxu0 %v24
  %46 = vmatpush.msra.mxu0 %v23
  %47 = vmatpush.msra.mxu0 %v22
  %48 = vmatpush.msra.mxu0 %v21
  %49 = vmatmul.f32.gmra.mxu0 %v28
  %v50 = vpop.f32.mrf.mxu0
  %v51 = vadd.f32 %v25, %v50
  %52 = vmatmul.f32.gmra.mxu0 %v31
  %v53 = vpop.f32.mrf.mxu0
  %v54 = vadd.f32 %v25, %v53
  %55 = vdwg.mxu0
  %v56 = vmax.f32 %v51, %v54
  %v57 = vsub.f32 %v51, %v56
  %v58 = vmul.f32 %v57, 1.442695
  %v59 = vpow.pop %v58
  %v60 = vsub.f32 %v54, %v56
  %v61 = vmul.f32 %v60, 1.442695
  %v62 = vpow.pop %v61
  %v63 = vadd.f32 %v59, %v62
  %v64 = vlog2.pop %v63
  %v65 = vmul.f32 %v64, 0.6931472
  %v66 = vadd.f32 %v56, %v65
  %v67 = vsub.f32 %v51, %v66
  %v68 = vsub.f32 %v54, %v66
  %vm69 = vcmask 7168
  %70 = vst.msk [vmem:[%s4] sm:$0xff] %vm69, %v67
  %72 = vrot.lane.b32.xlu0 %v68, 1
  %v73 = vpop.permute.xlu0 %72
  %vm75 = vcmask 15368
  %76 = vst.msk [vmem:[%s4] sm:$0xff] %vm75, %v73
  // Predicated region
  $region18: #{tpu_custom_call.1} parent=0 // pred_check
    _
  $region19: #{tpu_custom_call.1} parent=0 // pred_check_branch
    %78 = sbr.rel (0) target = $region21
  $region20: #{tpu_custom_call.1} parent=0 // pred_region
    _
  $region21: #{tpu_custom_call.1} parent=0 // pred_fallthru
    _
  // Predicated region
  $region22: #{tpu_custom_call.1} parent=0 // pred_check
    _
  $region23: #{tpu_custom_call.1} parent=0 // pred_check_branch
    %80 = sbr.rel (0) target = $region25
  $region24: #{tpu_custom_call.1} parent=0 // pred_region
    _
  $region25: #{tpu_custom_call.1} parent=0 // pred_fallthru
    _

</llo_original>
